<compile_context>
chip_gen: v5e
topology: v5e:2x2
jax: 0.10.0
libtpu: 0.0.40
codegen_flags: <defaults>
</compile_context>

<pallas_src>
import functools

import numpy as np

import jax
import jax.numpy as jnp
from jax import lax
from jax.experimental import pallas as pl
from jax.experimental.pallas import tpu as pltpu

# ---- configuration matching the PyTorch module ------------------------------
BLOCK_SIZE = 32          # size of the causal `tril` buffer (T must be <= this)
N_EMBD = 32
HEAD_DIM = 32
N_HEADS = 4
HEAD_SUB = HEAD_DIM // N_HEADS   # per-head channel dim (C // H) = 8

_NEG_BIG = -1e30         # finite large-negative bias (NaN-safe masking)


def mha_kernel(x_ref, wqkv_ref, wpt_ref, bp_ref, bias_ref, o_ref, *, H, C):
    """Whole problem in one grid-less invocation (everything is tiny).

    x_ref    : (B*T, E)       flattened input rows
    wqkv_ref : (E, 3C)        fused, pre-transposed QKV weight (q-cols pre-scaled)
    wpt_ref  : (C, C)         pre-transposed output-projection weight
    bp_ref   : (1, C)         output-projection bias
    bias_ref : (H*B*T, B*T)   block-diagonal causal additive bias, tiled per head
    o_ref    : (B*T, C)       flattened output rows
    """
    Dh = C // H
    BT = x_ref.shape[0]

    x2 = x_ref[...]                                                        # (BT, E)

    # Fused QKV projection: one MXU matmul (weights pre-transposed, q pre-scaled).
    qkv = jnp.dot(x2, wqkv_ref[...], preferred_element_type=jnp.float32)   # (BT, 3C)

    q = qkv[:, 0 * C:1 * C]     # C**-0.5 already folded into the weight columns
    k = qkv[:, 1 * C:2 * C]
    v = qkv[:, 2 * C:3 * C]

    # Per-head q @ k^T (contract channel dims, no explicit transpose), stacked
    # along the sublane axis so the softmax runs ONCE over all heads.
    scores = []
    for h in range(H):                       # static, fully unrolled (H = 4)
        sl = slice(h * Dh, (h + 1) * Dh)
        scores.append(
            lax.dot_general(q[:, sl], k[:, sl], (((1,), (1,)), ((), ())),
                            preferred_element_type=jnp.float32))           # (BT, BT)
    s = jnp.concatenate(scores, axis=0) + bias_ref[...]                    # (H*BT, BT)

    # Batched (all-heads) unnormalized softmax.
    s = s - jnp.max(s, axis=-1, keepdims=True)
    p = jnp.exp(s)
    # EUP approximate reciprocal; normalization applied AFTER the PV matmul.
    recip = pl.reciprocal(jnp.sum(p, axis=-1, keepdims=True), approx=True)  # (H*BT, 1)

    # TODO(synk): attention-weight nn.Dropout skipped (identity in eval mode).

    # Per-head PV matmul + accumulation through the matching rows of W_proj^T.
    # Equivalent to concat(heads) @ W_proj^T, without a lane-axis concat.
    acc = bp_ref[...].astype(jnp.float32)                                   # (1, C) -> broadcast
    for h in range(H):
        cs = slice(h * Dh, (h + 1) * Dh)     # channel slice of v / rows of wpt
        rs = slice(h * BT, (h + 1) * BT)     # row slice of stacked p / recip
        oh = jnp.dot(p[rs, :], v[:, cs], preferred_element_type=jnp.float32)  # (BT, Dh)
        oh = oh * recip[rs, :]               # normalize on the small tile
        acc = acc + jnp.dot(oh, wpt_ref[cs, :], preferred_element_type=jnp.float32)

    # TODO(synk): final nn.Dropout skipped (identity in eval mode).
    o_ref[...] = acc.astype(o_ref.dtype)


# ---- one-time parameter / constant preparation (hoisted out of the call path)
def prepare_weights(wq, wk, wv, wp):
    """Fuse + pre-transpose the PyTorch-Linear weights; fold the softmax scale
    into the q-columns. Run ONCE at parameter-setup time."""
    C = wq.shape[0]
    scale = C ** (-0.5)       # reference scales by head_dim**-0.5 (full C), not Dh
    wqkv = jnp.concatenate([(wq * scale).T, wk.T, wv.T], axis=1)   # (E, 3C)
    wpt = wp.T                                                     # (C, C)
    return wqkv, wpt


def make_causal_bias(B, T, H):
    """Block-diagonal causal additive bias over the flattened (B*T) axis,
    pre-tiled per head to (H*B*T, B*T). Built with numpy (no XLA ops)."""
    idx = np.arange(B * T)
    row, col = idx[:, None], idx[None, :]
    ok = ((row // T) == (col // T)) & ((row % T) >= (col % T))
    bias = np.where(ok, 0.0, _NEG_BIG).astype(np.float32)          # (B*T, B*T)
    return jnp.asarray(np.tile(bias, (H, 1)))                      # (H*B*T, B*T)


@jax.jit
def multi_head_attention(x, wqkv, wpt, bp, bias):
    """x: (B, T, E); wqkv: (E, 3C); wpt: (C, C); bp: (1, C);
    bias: (H*B*T, B*T) -> (B, T, C)."""
    B, T, E = x.shape
    C = wpt.shape[0]

    x2d = x.reshape(B * T, E)   # free, contiguous reshape

    kernel = functools.partial(mha_kernel, H=N_HEADS, C=C)
    vmem = pl.BlockSpec(memory_space=pltpu.MemorySpace.VMEM)
    out2d = pl.pallas_call(
        kernel,
        out_shape=jax.ShapeDtypeStruct((B * T, C), x.dtype),
        in_specs=[vmem, vmem, vmem, vmem, vmem],
        out_specs=vmem,
    )(x2d, wqkv, wpt, bp, bias)
    return out2d.reshape(B, T, C)


def mha_reference(x, wq, wk, wv, wp, bp):
    """Pure-JAX reference mirroring the PyTorch forward (dropout = identity)."""
    B, T, E = x.shape
    H, C = N_HEADS, HEAD_DIM
    Dh = C // H
    q = jnp.einsum('bte,ce->btc', x, wq).reshape(B, T, H, Dh).transpose(0, 2, 1, 3)
    k = jnp.einsum('bte,ce->btc', x, wk).reshape(B, T, H, Dh).transpose(0, 2, 1, 3)
    v = jnp.einsum('bte,ce->btc', x, wv).reshape(B, T, H, Dh).transpose(0, 2, 1, 3)
    wei = jnp.einsum('bhtd,bhsd->bhts', q, k) * C ** (-0.5)
    mask = jnp.tril(jnp.ones((T, T), dtype=bool))
    wei = jnp.where(mask[None, None], wei, -jnp.inf)
    wei = jax.nn.softmax(wei, axis=-1)
    out = jnp.einsum('bhts,bhsd->bhtd', wei, v).transpose(0, 2, 1, 3).reshape(B, T, C)
    return jnp.einsum('btc,dc->btd', out, wp) + bp


if __name__ == "__main__":
    key = jax.random.PRNGKey(0)
    kx, kq, kk, kv, kp, kb = jax.random.split(key, 6)

    B, T = 2, 8   # T <= block_size (32)
    assert T <= BLOCK_SIZE
    x = jax.random.normal(kx, (B, T, N_EMBD), dtype=jnp.float32)

    # deterministic synthetic parameters (PyTorch Linear-shaped)
    wq = jax.random.normal(kq, (HEAD_DIM, N_EMBD), dtype=jnp.float32) * 0.1
    wk = jax.random.normal(kk, (HEAD_DIM, N_EMBD), dtype=jnp.float32) * 0.1
    wv = jax.random.normal(kv, (HEAD_DIM, N_EMBD), dtype=jnp.float32) * 0.1
    wp = jax.random.normal(kp, (HEAD_DIM, HEAD_DIM), dtype=jnp.float32) * 0.1
    bp = jax.random.normal(kb, (1, HEAD_DIM), dtype=jnp.float32) * 0.1

    # One-time setup (not on the per-call path).
    wqkv, wpt = prepare_weights(wq, wk, wv, wp)
    bias = make_causal_bias(B, T, N_HEADS)

    out = multi_head_attention(x, wqkv, wpt, bp, bias)
    out = jax.block_until_ready(out)

    ref = mha_reference(x, wq, wk, wv, wp, bp)
    assert out.shape == (B, T, HEAD_DIM)
    # Tolerance accounts for the EUP approximate-reciprocal softmax normalization.
    assert jnp.allclose(out, ref, atol=5e-3, rtol=5e-3), "mismatch vs JAX reference"

    print("KERNEL_OK")
</pallas_src>

<mosaic_0001>
module attributes {stable_mosaic.version = 11 : i64} {
  func.func @mha_kernel(%arg0: memref<16x32xf32, #tpu.memory_space<vmem>>, %arg1: memref<32x96xf32, #tpu.memory_space<vmem>>, %arg2: memref<32x32xf32, #tpu.memory_space<vmem>>, %arg3: memref<1x32xf32, #tpu.memory_space<vmem>>, %arg4: memref<64x16xf32, #tpu.memory_space<vmem>>, %arg5: memref<16x32xf32, #tpu.memory_space<vmem>>) attributes {dimension_semantics = [], scalar_prefetch = 0 : i64, scratch_operands = 0 : i64, tpu.core_type = #tpu.core_type<tc>} {
    %c0 = arith.constant 0 : index
    %c0_0 = arith.constant 0 : index
    %0 = vector.load %arg0[%c0, %c0_0] : memref<16x32xf32, #tpu.memory_space<vmem>>, vector<16x32xf32>
    %c0_1 = arith.constant 0 : index
    %c0_2 = arith.constant 0 : index
    %1 = vector.load %arg1[%c0_1, %c0_2] : memref<32x96xf32, #tpu.memory_space<vmem>>, vector<32x96xf32>
    %cst = arith.constant dense<0.000000e+00> : vector<16x96xf32>
    %2 = tpu.matmul %0, %1, %cst {dimension_numbers = #tpu.dot_dimension_numbers<[1], [0], [0], [1], [0, 0, 1, 1], [], []>} : vector<16x32xf32>, vector<32x96xf32>, vector<16x96xf32> -> vector<16x96xf32>
    %3 = vector.extract_strided_slice %2 {offsets = [0, 0], sizes = [16, 32], strides = [1, 1]} : vector<16x96xf32> to vector<16x32xf32>
    %4 = vector.extract_strided_slice %2 {offsets = [0, 32], sizes = [16, 32], strides = [1, 1]} : vector<16x96xf32> to vector<16x32xf32>
    %5 = vector.extract_strided_slice %2 {offsets = [0, 64], sizes = [16, 32], strides = [1, 1]} : vector<16x96xf32> to vector<16x32xf32>
    %6 = vector.extract_strided_slice %3 {offsets = [0, 0], sizes = [16, 8], strides = [1, 1]} : vector<16x32xf32> to vector<16x8xf32>
    %7 = vector.extract_strided_slice %4 {offsets = [0, 0], sizes = [16, 8], strides = [1, 1]} : vector<16x32xf32> to vector<16x8xf32>
    %cst_3 = arith.constant dense<0.000000e+00> : vector<16x16xf32>
    %8 = tpu.matmul %6, %7, %cst_3 {dimension_numbers = #tpu.dot_dimension_numbers<[1], [1], [0], [0], [0, 0, 1, 0], [], []>} : vector<16x8xf32>, vector<16x8xf32>, vector<16x16xf32> -> vector<16x16xf32>
    %9 = vector.extract_strided_slice %3 {offsets = [0, 8], sizes = [16, 8], strides = [1, 1]} : vector<16x32xf32> to vector<16x8xf32>
    %10 = vector.extract_strided_slice %4 {offsets = [0, 8], sizes = [16, 8], strides = [1, 1]} : vector<16x32xf32> to vector<16x8xf32>
    %cst_4 = arith.constant dense<0.000000e+00> : vector<16x16xf32>
    %11 = tpu.matmul %9, %10, %cst_4 {dimension_numbers = #tpu.dot_dimension_numbers<[1], [1], [0], [0], [0, 0, 1, 0], [], []>} : vector<16x8xf32>, vector<16x8xf32>, vector<16x16xf32> -> vector<16x16xf32>
    %12 = vector.extract_strided_slice %3 {offsets = [0, 16], sizes = [16, 8], strides = [1, 1]} : vector<16x32xf32> to vector<16x8xf32>
    %13 = vector.extract_strided_slice %4 {offsets = [0, 16], sizes = [16, 8], strides = [1, 1]} : vector<16x32xf32> to vector<16x8xf32>
    %cst_5 = arith.constant dense<0.000000e+00> : vector<16x16xf32>
    %14 = tpu.matmul %12, %13, %cst_5 {dimension_numbers = #tpu.dot_dimension_numbers<[1], [1], [0], [0], [0, 0, 1, 0], [], []>} : vector<16x8xf32>, vector<16x8xf32>, vector<16x16xf32> -> vector<16x16xf32>
    %15 = vector.extract_strided_slice %3 {offsets = [0, 24], sizes = [16, 8], strides = [1, 1]} : vector<16x32xf32> to vector<16x8xf32>
    %16 = vector.extract_strided_slice %4 {offsets = [0, 24], sizes = [16, 8], strides = [1, 1]} : vector<16x32xf32> to vector<16x8xf32>
    %cst_6 = arith.constant dense<0.000000e+00> : vector<16x16xf32>
    %17 = tpu.matmul %15, %16, %cst_6 {dimension_numbers = #tpu.dot_dimension_numbers<[1], [1], [0], [0], [0, 0, 1, 0], [], []>} : vector<16x8xf32>, vector<16x8xf32>, vector<16x16xf32> -> vector<16x16xf32>
    %18 = tpu.concatenate %8, %11, %14, %17 in 0 : vector<16x16xf32>, vector<16x16xf32>, vector<16x16xf32>, vector<16x16xf32> -> vector<64x16xf32>
    %c0_7 = arith.constant 0 : index
    %c0_8 = arith.constant 0 : index
    %19 = vector.load %arg4[%c0_7, %c0_8] : memref<64x16xf32, #tpu.memory_space<vmem>>, vector<64x16xf32>
    %20 = arith.addf %18, %19 : vector<64x16xf32>
    %cst_9 = arith.constant dense<0xFF800000> : vector<64xf32>
    %21 = vector.multi_reduction <maximumf>, %20, %cst_9 [1] : vector<64x16xf32> to vector<64xf32>
    %22 = vector.shape_cast %21 : vector<64xf32> to vector<64x1xf32>
    %23 = vector.broadcast %22 : vector<64x1xf32> to vector<64x16xf32>
    %24 = arith.subf %20, %23 : vector<64x16xf32>
    %25 = math.exp %24 : vector<64x16xf32>
    %cst_10 = arith.constant dense<0.000000e+00> : vector<64xf32>
    %26 = vector.multi_reduction <add>, %25, %cst_10 [1] : vector<64x16xf32> to vector<64xf32>
    %27 = vector.shape_cast %26 : vector<64xf32> to vector<64x1xf32>
    %28 = tpu.reciprocal %27 {approx = true} : vector<64x1xf32> -> vector<64x1xf32>
    %c0_11 = arith.constant 0 : index
    %c0_12 = arith.constant 0 : index
    %29 = vector.load %arg3[%c0_11, %c0_12] : memref<1x32xf32, #tpu.memory_space<vmem>>, vector<1x32xf32>
    %30 = vector.extract_strided_slice %25 {offsets = [0, 0], sizes = [16, 16], strides = [1, 1]} : vector<64x16xf32> to vector<16x16xf32>
    %31 = vector.extract_strided_slice %5 {offsets = [0, 0], sizes = [16, 8], strides = [1, 1]} : vector<16x32xf32> to vector<16x8xf32>
    %cst_13 = arith.constant dense<0.000000e+00> : vector<16x8xf32>
    %32 = tpu.matmul %30, %31, %cst_13 {dimension_numbers = #tpu.dot_dimension_numbers<[1], [0], [0], [1], [0, 0, 1, 1], [], []>} : vector<16x16xf32>, vector<16x8xf32>, vector<16x8xf32> -> vector<16x8xf32>
    %33 = vector.extract_strided_slice %28 {offsets = [0, 0], sizes = [16, 1], strides = [1, 1]} : vector<64x1xf32> to vector<16x1xf32>
    %34 = vector.broadcast %33 : vector<16x1xf32> to vector<16x8xf32>
    %35 = arith.mulf %32, %34 : vector<16x8xf32>
    %c0_14 = arith.constant 0 : index
    %c0_15 = arith.constant 0 : index
    %36 = vector.load %arg2[%c0_14, %c0_15] : memref<32x32xf32, #tpu.memory_space<vmem>>, vector<8x32xf32>
    %cst_16 = arith.constant dense<0.000000e+00> : vector<16x32xf32>
    %37 = tpu.matmul %35, %36, %cst_16 {dimension_numbers = #tpu.dot_dimension_numbers<[1], [0], [0], [1], [0, 0, 1, 1], [], []>} : vector<16x8xf32>, vector<8x32xf32>, vector<16x32xf32> -> vector<16x32xf32>
    %38 = vector.broadcast %29 : vector<1x32xf32> to vector<16x32xf32>
    %39 = arith.addf %38, %37 : vector<16x32xf32>
    %40 = vector.extract_strided_slice %25 {offsets = [16, 0], sizes = [16, 16], strides = [1, 1]} : vector<64x16xf32> to vector<16x16xf32>
    %41 = vector.extract_strided_slice %5 {offsets = [0, 8], sizes = [16, 8], strides = [1, 1]} : vector<16x32xf32> to vector<16x8xf32>
    %cst_17 = arith.constant dense<0.000000e+00> : vector<16x8xf32>
    %42 = tpu.matmul %40, %41, %cst_17 {dimension_numbers = #tpu.dot_dimension_numbers<[1], [0], [0], [1], [0, 0, 1, 1], [], []>} : vector<16x16xf32>, vector<16x8xf32>, vector<16x8xf32> -> vector<16x8xf32>
    %43 = vector.extract_strided_slice %28 {offsets = [16, 0], sizes = [16, 1], strides = [1, 1]} : vector<64x1xf32> to vector<16x1xf32>
    %44 = vector.broadcast %43 : vector<16x1xf32> to vector<16x8xf32>
    %45 = arith.mulf %42, %44 : vector<16x8xf32>
    %c8 = arith.constant 8 : index
    %c0_18 = arith.constant 0 : index
    %46 = vector.load %arg2[%c8, %c0_18] : memref<32x32xf32, #tpu.memory_space<vmem>>, vector<8x32xf32>
    %cst_19 = arith.constant dense<0.000000e+00> : vector<16x32xf32>
    %47 = tpu.matmul %45, %46, %cst_19 {dimension_numbers = #tpu.dot_dimension_numbers<[1], [0], [0], [1], [0, 0, 1, 1], [], []>} : vector<16x8xf32>, vector<8x32xf32>, vector<16x32xf32> -> vector<16x32xf32>
    %48 = arith.addf %39, %47 : vector<16x32xf32>
    %49 = vector.extract_strided_slice %25 {offsets = [32, 0], sizes = [16, 16], strides = [1, 1]} : vector<64x16xf32> to vector<16x16xf32>
    %50 = vector.extract_strided_slice %5 {offsets = [0, 16], sizes = [16, 8], strides = [1, 1]} : vector<16x32xf32> to vector<16x8xf32>
    %cst_20 = arith.constant dense<0.000000e+00> : vector<16x8xf32>
    %51 = tpu.matmul %49, %50, %cst_20 {dimension_numbers = #tpu.dot_dimension_numbers<[1], [0], [0], [1], [0, 0, 1, 1], [], []>} : vector<16x16xf32>, vector<16x8xf32>, vector<16x8xf32> -> vector<16x8xf32>
    %52 = vector.extract_strided_slice %28 {offsets = [32, 0], sizes = [16, 1], strides = [1, 1]} : vector<64x1xf32> to vector<16x1xf32>
    %53 = vector.broadcast %52 : vector<16x1xf32> to vector<16x8xf32>
    %54 = arith.mulf %51, %53 : vector<16x8xf32>
    %c16 = arith.constant 16 : index
    %c0_21 = arith.constant 0 : index
    %55 = vector.load %arg2[%c16, %c0_21] : memref<32x32xf32, #tpu.memory_space<vmem>>, vector<8x32xf32>
    %cst_22 = arith.constant dense<0.000000e+00> : vector<16x32xf32>
    %56 = tpu.matmul %54, %55, %cst_22 {dimension_numbers = #tpu.dot_dimension_numbers<[1], [0], [0], [1], [0, 0, 1, 1], [], []>} : vector<16x8xf32>, vector<8x32xf32>, vector<16x32xf32> -> vector<16x32xf32>
    %57 = arith.addf %48, %56 : vector<16x32xf32>
    %58 = vector.extract_strided_slice %25 {offsets = [48, 0], sizes = [16, 16], strides = [1, 1]} : vector<64x16xf32> to vector<16x16xf32>
    %59 = vector.extract_strided_slice %5 {offsets = [0, 24], sizes = [16, 8], strides = [1, 1]} : vector<16x32xf32> to vector<16x8xf32>
    %cst_23 = arith.constant dense<0.000000e+00> : vector<16x8xf32>
    %60 = tpu.matmul %58, %59, %cst_23 {dimension_numbers = #tpu.dot_dimension_numbers<[1], [0], [0], [1], [0, 0, 1, 1], [], []>} : vector<16x16xf32>, vector<16x8xf32>, vector<16x8xf32> -> vector<16x8xf32>
    %61 = vector.extract_strided_slice %28 {offsets = [48, 0], sizes = [16, 1], strides = [1, 1]} : vector<64x1xf32> to vector<16x1xf32>
    %62 = vector.broadcast %61 : vector<16x1xf32> to vector<16x8xf32>
    %63 = arith.mulf %60, %62 : vector<16x8xf32>
    %c24 = arith.constant 24 : index
    %c0_24 = arith.constant 0 : index
    %64 = vector.load %arg2[%c24, %c0_24] : memref<32x32xf32, #tpu.memory_space<vmem>>, vector<8x32xf32>
    %cst_25 = arith.constant dense<0.000000e+00> : vector<16x32xf32>
    %65 = tpu.matmul %63, %64, %cst_25 {dimension_numbers = #tpu.dot_dimension_numbers<[1], [0], [0], [1], [0, 0, 1, 1], [], []>} : vector<16x8xf32>, vector<8x32xf32>, vector<16x32xf32> -> vector<16x32xf32>
    %66 = arith.addf %57, %65 : vector<16x32xf32>
    %c0_26 = arith.constant 0 : index
    %c0_27 = arith.constant 0 : index
    %67 = vector.load %arg5[%c0_26, %c0_27] : memref<16x32xf32, #tpu.memory_space<vmem>>, vector<16x32xf32>
    tpu.vector_store %arg5[%c0_26, %c0_27], %66 {strides = array<i32>} : memref<16x32xf32, #tpu.memory_space<vmem>>, vector<16x32xf32>,
    return
  }
}

</mosaic_0001>

<llo_original>
// kernel: multi_head_attention.1
$region0: #{multi_head_attention.1}
  #allocation0 [shape = 'u32[]', space=smem, size = 0x4, offset = 0x4, fixed_abs, tag = 'smem constant byte address 0x4 - core index']
  #allocation1 [shape = 'u32[72,128]{1,0:T(1,128)}', space=vmem, size = 0x9000, scoped, tag = 'internal scratch']
  %s0 = inlined_call_operand.vmem [shape: f32[16,32], index: 0, kind: input, shape index: {}]
  %s1 = inlined_call_operand.vmem [shape: f32[32,96], index: 1, kind: input, shape index: {}]
  %s2 = inlined_call_operand.vmem [shape: f32[32,32], index: 2, kind: input, shape index: {}]
  %s3 = inlined_call_operand.vmem [shape: f32[1,32], index: 3, kind: input, shape index: {}]
  %s4 = inlined_call_operand.vmem [shape: f32[64,16], index: 4, kind: input, shape index: {}]
  %s5 = inlined_call_operand.hbm [shape: f32[16,32], index: 5, kind: output, shape index: {}]
  %s6 = sld [smem:[#allocation0]]
  $region30: #{multi_head_attention.1} parent=0
    _
  %s8 = ssub.s32 1, %s6
  %s9 = scalar_select 0, %s8, %s6
  $region1: #{multi_head_attention.1} parent=0
    #allocation2 [shape = 'u8[8192]{0}', space=vmem, size = 0x2000, scoped, tag = 'output window, operand 0, single buffered']
    #allocation3 [shape = 's32[1]{0}', space=sflag, size = 0x4, scoped, tag = 'scoped memory for multi_head_attention.1']
    %10 = vsyncpa [#allocation3], 0
    // Predicated region
    $region2: #{multi_head_attention.1} parent=1 // pred_check
      _
    $region3: #{multi_head_attention.1} parent=1 // pred_check_branch
      %12 = sbr.rel (0) target = $region5
    $region4: #{multi_head_attention.1} parent=1 // pred_region
      _
    $region5: #{multi_head_attention.1} parent=1 // pred_fallthru
      _
    // Predicated region
    $region6: #{multi_head_attention.1} parent=1 // pred_check
      _
    $region7: #{multi_head_attention.1} parent=1 // pred_check_branch
      %14 = sbr.rel (0) target = $region9
    $region8: #{multi_head_attention.1} parent=1 // pred_region
      _
    $region9: #{multi_head_attention.1} parent=1 // pred_fallthru
      _
    // Predicated region
    $region10: #{multi_head_attention.1} parent=1 // pred_check
      _
    $region11: #{multi_head_attention.1} parent=1 // pred_check_branch
      %16 = sbr.rel (0) target = $region13
    $region12: #{multi_head_attention.1} parent=1 // pred_region
      _
    $region13: #{multi_head_attention.1} parent=1 // pred_fallthru
      _
    // Predicated region
    $region14: #{multi_head_attention.1} parent=1 // pred_check
      _
    $region15: #{multi_head_attention.1} parent=1 // pred_check_branch
      %18 = sbr.rel (0) target = $region17
    $region16: #{multi_head_attention.1} parent=1 // pred_region
      _
    $region17: #{multi_head_attention.1} parent=1 // pred_fallthru
      _
    // Predicated region
    $region18: #{multi_head_attention.1} parent=1 // pred_check
      _
    $region19: #{multi_head_attention.1} parent=1 // pred_check_branch
      %20 = sbr.rel (0) target = $region21
    $region20: #{multi_head_attention.1} parent=1 // pred_region
      _
    $region21: #{multi_head_attention.1} parent=1 // pred_fallthru
      _
    %v21 = vld [vmem:[%s0] sm:$0xff]
    %v22 = vld [vmem:[%s0 + $0x8] sm:$0xff]
    %v23 = vld [vmem:[%s1] sm:$0xff]
    %v24 = vld [vmem:[%s1 + $0x8] sm:$0xff]
    %v25 = vld [vmem:[%s1 + $0x10] sm:$0xff]
    %v26 = vld [vmem:[%s1 + $0x18] sm:$0xff]
    %vm27 = vcmask 261120
    %v29 = vsel %vm27, %v21, 0
    %v32 = vsel %vm27, %v22, 0
    %34 = vmatpush.msra.mxu0 0.0
    %35 = vmatpush.msra.mxu0 0.0
    %36 = vmatpush.msra.mxu0 0.0
    %37 = vmatpush.msra.mxu0 0.0
    %38 = vmatpush.msra.mxu0 0.0
    %39 = vmatpush.msra.mxu0 0.0
    %40 = vmatpush.msra.mxu0 0.0
    %41 = vmatpush.msra.mxu0 0.0
    %42 = vmatpush.msra.mxu0 0.0
    %43 = vmatpush.msra.mxu0 0.0
    %44 = vmatpush.msra.mxu0 0.0
    %45 = vmatpush.msra.mxu0 0.0
    %46 = vmatpush.msra.mxu0 %v26
    %47 = vmatpush.msra.mxu0 %v25
    %48 = vmatpush.msra.mxu0 %v24
    %49 = vmatpush.msra.mxu0 %v23
    %50 = vmatmul.f32.gmra.mxu0 %v29
    %v51 = vpop.f32.mrf.mxu0
    %v52 = vadd.f32 0.0, %v51
    %53 = vmatmul.f32.gmra.mxu0 %v32
    %v54 = vpop.f32.mrf.mxu0
    %v55 = vadd.f32 0.0, %v54
    %56 = vdwg.mxu0
    %59 = vrot.lane.b32.xlu0 %v52, 96
    %v60 = vpop.permute.xlu0 %59
    %61 = vrot.lane.b32.xlu0 %v55, 96
    %v62 = vpop.permute.xlu0 %61
    %vm63 = vcmask 64512
    %v64 = vsel %vm63, %v52, 0
    %v66 = vsel %vm63, %v55, 0
    %v68 = vsel %vm63, %v60, 0
    %v70 = vsel %vm63, %v62, 0
    %72 = vmatpush.xpose.msra.mxu0 0.0
    %73 = vmatpush.xpose.msra.mxu0 0.0
    %74 = vmatpush.xpose.msra.mxu0 0.0
    %75 = vmatpush.xpose.msra.mxu0 0.0
    %76 = vmatpush.xpose.msra.mxu0 0.0
    %77 = vmatpush.xpose.msra.mxu0 0.0
    %78 = vmatpush.xpose.msra.mxu0 0.0
    %79 = vmatpush.xpose.msra.mxu0 0.0
    %80 = vmatpush.xpose.msra.mxu0 0.0
    %81 = vmatpush.xpose.msra.mxu0 0.0
    %82 = vmatpush.xpose.msra.mxu0 0.0
    %83 = vmatpush.xpose.msra.mxu0 0.0
    %84 = vmatpush.xpose.msra.mxu0 0.0
    %85 = vmatpush.xpose.msra.mxu0 0.0
    %86 = vmatpush.xpose.msra.mxu0 %v70
    %87 = vmatpush.xpose.msra.mxu0 %v68
    %88 = vmatmul.f32.gmra.mxu0 %v64
    %v89 = vpop.f32.mrf.mxu0
    %v90 = vadd.f32 0.0, %v89
    %91 = vmatmul.f32.gmra.mxu0 %v66
    %v92 = vpop.f32.mrf.mxu0
    %v93 = vadd.f32 0.0, %v92
    %94 = vdwg.mxu0
    %95 = vrot.lane.b32.xlu0 %v52, 120
    %v96 = vpop.permute.xlu0 %95
    %97 = vrot.lane.b32.xlu0 %v55, 120
    %v98 = vpop.permute.xlu0 %97
    %99 = vrot.lane.b32.xlu0 %v52, 88
    %v100 = vpop.permute.xlu0 %99
    %101 = vrot.lane.b32.xlu0 %v55, 88
    %v102 = vpop.permute.xlu0 %101
    %v103 = vsel %vm63, %v96, 0
    %v105 = vsel %vm63, %v98, 0
    %v107 = vsel %vm63, %v100, 0
    %v109 = vsel %vm63, %v102, 0
    %111 = vmatpush.xpose.msra.mxu0 0.0
    %112 = vmatpush.xpose.msra.mxu0 0.0
    %113 = vmatpush.xpose.msra.mxu0 0.0
    %114 = vmatpush.xpose.msra.mxu0 0.0
    %115 = vmatpush.xpose.msra.mxu0 0.0
    %116 = vmatpush.xpose.msra.mxu0 0.0
    %117 = vmatpush.xpose.msra.mxu0 0.0
    %118 = vmatpush.xpose.msra.mxu0 0.0
    %119 = vmatpush.xpose.msra.mxu0 0.0
    %120 = vmatpush.xpose.msra.mxu0 0.0
    %121 = vmatpush.xpose.msra.mxu0 0.0
    %122 = vmatpush.xpose.msra.mxu0 0.0
    %123 = vmatpush.xpose.msra.mxu0 0.0
    %124 = vmatpush.xpose.msra.mxu0 0.0
    %125 = vmatpush.xpose.msra.mxu0 %v109
    %126 = vmatpush.xpose.msra.mxu0 %v107
    %127 = vmatmul.f32.gmra.mxu0 %v103
    %v128 = vpop.f32.mrf.mxu0
    %v129 = vadd.f32 0.0, %v128
    %130 = vmatmul.f32.gmra.mxu0 %v105
    %v131 = vpop.f32.mrf.mxu0
    %v132 = vadd.f32 0.0, %v131
    %133 = vdwg.mxu0
    %134 = vrot.lane.b32.xlu0 %v52, 112
    %v135 = vpop.permute.xlu0 %134
    %136 = vrot.lane.b32.xlu0 %v55, 112
    %v137 = vpop.permute.xlu0 %136
    %138 = vrot.lane.b32.xlu0 %v52, 80
    %v139 = vpop.permute.xlu0 %138
    %140 = vrot.lane.b32.xlu0 %v55, 80
    %v141 = vpop.permute.xlu0 %140
    %v142 = vsel %vm63, %v135, 0
    %v144 = vsel %vm63, %v137, 0
    %v146 = vsel %vm63, %v139, 0
    %v148 = vsel %vm63, %v141, 0
    %150 = vmatpush.xpose.msra.mxu0 0.0
    %151 = vmatpush.xpose.msra.mxu0 0.0
    %152 = vmatpush.xpose.msra.mxu0 0.0
    %153 = vmatpush.xpose.msra.mxu0 0.0
    %154 = vmatpush.xpose.msra.mxu0 0.0
    %155 = vmatpush.xpose.msra.mxu0 0.0
    %156 = vmatpush.xpose.msra.mxu0 0.0
    %157 = vmatpush.xpose.msra.mxu0 0.0
    %158 = vmatpush.xpose.msra.mxu0 0.0
    %159 = vmatpush.xpose.msra.mxu0 0.0
    %160 = vmatpush.xpose.msra.mxu0 0.0
    %161 = vmatpush.xpose.msra.mxu0 0.0
    %162 = vmatpush.xpose.msra.mxu0 0.0
    %163 = vmatpush.xpose.msra.mxu0 0.0
    %164 = vmatpush.xpose.msra.mxu0 %v148
    %165 = vmatpush.xpose.msra.mxu0 %v146
    %166 = vmatmul.f32.gmra.mxu0 %v142
    %v167 = vpop.f32.mrf.mxu0
    %v168 = vadd.f32 0.0, %v167
    %169 = vmatmul.f32.gmra.mxu0 %v144
    %v170 = vpop.f32.mrf.mxu0
    %v171 = vadd.f32 0.0, %v170
    %172 = vdwg.mxu0
    %173 = vrot.lane.b32.xlu0 %v52, 104
    %v174 = vpop.permute.xlu0 %173
    %175 = vrot.lane.b32.xlu0 %v55, 104
    %v176 = vpop.permute.xlu0 %175
    %177 = vrot.lane.b32.xlu0 %v52, 72
    %v178 = vpop.permute.xlu0 %177
    %179 = vrot.lane.b32.xlu0 %v55, 72
    %v180 = vpop.permute.xlu0 %179
    %v181 = vsel %vm63, %v174, 0
    %v183 = vsel %vm63, %v176, 0
    %v185 = vsel %vm63, %v178, 0
    %v187 = vsel %vm63, %v180, 0
    %189 = vmatpush.xpose.msra.mxu0 0.0
    %190 = vmatpush.xpose.msra.mxu0 0.0
    %191 = vmatpush.xpose.msra.mxu0 0.0
    %192 = vmatpush.xpose.msra.mxu0 0.0
    %193 = vmatpush.xpose.msra.mxu0 0.0
    %194 = vmatpush.xpose.msra.mxu0 0.0
    %195 = vmatpush.xpose.msra.mxu0 0.0
    %196 = vmatpush.xpose.msra.mxu0 0.0
    %197 = vmatpush.xpose.msra.mxu0 0.0
    %198 = vmatpush.xpose.msra.mxu0 0.0
    %199 = vmatpush.xpose.msra.mxu0 0.0
    %200 = vmatpush.xpose.msra.mxu0 0.0
    %201 = vmatpush.xpose.msra.mxu0 0.0
    %202 = vmatpush.xpose.msra.mxu0 0.0
    %203 = vmatpush.xpose.msra.mxu0 %v187
    %204 = vmatpush.xpose.msra.mxu0 %v185
    %205 = vmatmul.f32.gmra.mxu0 %v181
    %v206 = vpop.f32.mrf.mxu0
    %v207 = vadd.f32 0.0, %v206
    %208 = vmatmul.f32.gmra.mxu0 %v183
    %v209 = vpop.f32.mrf.mxu0
    %v210 = vadd.f32 0.0, %v209
    %211 = vdwg.mxu0
    %v212 = vld [vmem:[%s4] sm:$0xff]
    %v213 = vld [vmem:[%s4 + $0x8] sm:$0xff]
    %v214 = vld [vmem:[%s4 + $0x10] sm:$0xff]
    %v215 = vld [vmem:[%s4 + $0x18] sm:$0xff]
    %v216 = vld [vmem:[%s4 + $0x20] sm:$0xff]
    %v217 = vld [vmem:[%s4 + $0x28] sm:$0xff]
    %v218 = vld [vmem:[%s4 + $0x30] sm:$0xff]
    %v219 = vld [vmem:[%s4 + $0x38] sm:$0xff]
    %v220 = vadd.f32 %v90, %v212
    %v221 = vadd.f32 %v93, %v213
    %v222 = vadd.f32 %v129, %v214
    %v223 = vadd.f32 %v132, %v215
    %v224 = vadd.f32 %v168, %v216
    %v225 = vadd.f32 %v171, %v217
    %v226 = vadd.f32 %v207, %v218
    %v227 = vadd.f32 %v210, %v219
    %vm228 = vcmask 130048
    %v229 = vsel %vm228, %v220, -inf
    %230 = vmax.xlane.f32.xlu0 %v229
    %v231 = vpop.xlane.xlu0 %230
    %v232 = vsel %vm228, %v221, -inf
    %233 = vmax.xlane.f32.xlu0 %v232
    %v234 = vpop.xlane.xlu0 %233
    %v235 = vsel %vm228, %v222, -inf
    %236 = vmax.xlane.f32.xlu0 %v235
    %v237 = vpop.xlane.xlu0 %236
    %v238 = vsel %vm228, %v223, -inf
    %239 = vmax.xlane.f32.xlu0 %v238
    %v240 = vpop.xlane.xlu0 %239
    %v241 = vsel %vm228, %v224, -inf
    %242 = vmax.xlane.f32.xlu0 %v241
    %v243 = vpop.xlane.xlu0 %242
    %v244 = vsel %vm228, %v225, -inf
    %245 = vmax.xlane.f32.xlu0 %v244
    %v246 = vpop.xlane.xlu0 %245
    %v247 = vsel %vm228, %v226, -inf
    %248 = vmax.xlane.f32.xlu0 %v247
    %v249 = vpop.xlane.xlu0 %248
    %v250 = vsel %vm228, %v227, -inf
    %251 = vmax.xlane.f32.xlu0 %v250
    %v252 = vpop.xlane.xlu0 %251
    %v253 = vsub.f32 %v220, %v231
    %v254 = vsub.f32 %v221, %v234
    %v255 = vsub.f32 %v222, %v237
    %v256 = vsub.f32 %v223, %v240
    %v257 = vsub.f32 %v224, %v243
    %v258 = vsub.f32 %v225, %v246
    %v259 = vsub.f32 %v226, %v249
    %v260 = vsub.f32 %v227, %v252
    %v261 = vmul.f32 %v253, 1.442695
    %v262 = vpow.pop %v261
    %v263 = vmul.f32 %v254, 1.442695
    %v264 = vpow.pop %v263
    %v265 = vmul.f32 %v255, 1.442695
    %v266 = vpow.pop %v265
    %v267 = vmul.f32 %v256, 1.442695
    %v268 = vpow.pop %v267
    %v269 = vmul.f32 %v257, 1.442695
    %v270 = vpow.pop %v269
    %v271 = vmul.f32 %v258, 1.442695
    %v272 = vpow.pop %v271
    %v273 = vmul.f32 %v259, 1.442695
    %v274 = vpow.pop %v273
    %v275 = vmul.f32 %v260, 1.442695
    %v276 = vpow.pop %v275
    %v277 = vsel %vm228, %v262, 0.0
    %278 = vadd.xlane.f32.xlu0 %v277
    %v279 = vpop.xlane.xlu0 %278
    %v280 = vsel %vm228, %v264, 0.0
    %281 = vadd.xlane.f32.xlu0 %v280
    %v282 = vpop.xlane.xlu0 %281
    %v283 = vsel %vm228, %v266, 0.0
    %284 = vadd.xlane.f32.xlu0 %v283
    %v285 = vpop.xlane.xlu0 %284
    %v286 = vsel %vm228, %v268, 0.0
    %287 = vadd.xlane.f32.xlu0 %v286
    %v288 = vpop.xlane.xlu0 %287
    %v289 = vsel %vm228, %v270, 0.0
    %290 = vadd.xlane.f32.xlu0 %v289
    %v291 = vpop.xlane.xlu0 %290
    %v292 = vsel %vm228, %v272, 0.0
    %293 = vadd.xlane.f32.xlu0 %v292
    %v294 = vpop.xlane.xlu0 %293
    %v295 = vsel %vm228, %v274, 0.0
    %296 = vadd.xlane.f32.xlu0 %v295
    %v297 = vpop.xlane.xlu0 %296
    %v298 = vsel %vm228, %v276, 0.0
    %299 = vadd.xlane.f32.xlu0 %v298
    %v300 = vpop.xlane.xlu0 %299
    %v301 = vrcp.pop %v279
    %v302 = vrcp.pop %v282
    %v303 = vrcp.pop %v285
    %v304 = vrcp.pop %v288
    %v305 = vrcp.pop %v291
    %v306 = vrcp.pop %v294
    %v307 = vrcp.pop %v297
    %v308 = vrcp.pop %v300
    %v309 = vld [vmem:[%s3] sm:$0x1]
    %310 = vrot.lane.b32.xlu0 %v52, 64
    %v311 = vpop.permute.xlu0 %310
    %312 = vrot.lane.b32.xlu0 %v55, 64
    %v313 = vpop.permute.xlu0 %312
    %v317 = vsel %vm228, %v262, 0
    %v320 = vsel %vm228, %v264, 0
    %322 = vmatpush.msra.mxu0 0.0
    %323 = vmatpush.msra.mxu0 0.0
    %324 = vmatpush.msra.mxu0 0.0
    %325 = vmatpush.msra.mxu0 0.0
    %326 = vmatpush.msra.mxu0 0.0
    %327 = vmatpush.msra.mxu0 0.0
    %328 = vmatpush.msra.mxu0 0.0
    %329 = vmatpush.msra.mxu0 0.0
    %330 = vmatpush.msra.mxu0 0.0
    %331 = vmatpush.msra.mxu0 0.0
    %332 = vmatpush.msra.mxu0 0.0
    %333 = vmatpush.msra.mxu0 0.0
    %334 = vmatpush.msra.mxu0 0.0
    %335 = vmatpush.msra.mxu0 0.0
    %336 = vmatpush.msra.mxu0 %v313
    %337 = vmatpush.msra.mxu0 %v311
    %338 = vmatmul.f32.gmra.mxu0 %v317
    %v339 = vpop.f32.mrf.mxu0
    %v340 = vadd.f32 0.0, %v339
    %341 = vmatmul.f32.gmra.mxu0 %v320
    %v342 = vpop.f32.mrf.mxu0
    %v343 = vadd.f32 0.0, %v342
    %344 = vdwg.mxu0
    %v345 = vmul.f32 %v340, %v301
    %v346 = vmul.f32 %v343, %v302
    %v347 = vld [vmem:[%s2] sm:$0xff]
    %v349 = vsel %vm63, %v345, 0
    %v352 = vsel %vm63, %v346, 0
    %354 = vmatpush.msra.mxu0 0.0
    %355 = vmatpush.msra.mxu0 0.0
    %356 = vmatpush.msra.mxu0 0.0
    %357 = vmatpush.msra.mxu0 0.0
    %358 = vmatpush.msra.mxu0 0.0
    %359 = vmatpush.msra.mxu0 0.0
    %360 = vmatpush.msra.mxu0 0.0
    %361 = vmatpush.msra.mxu0 0.0
    %362 = vmatpush.msra.mxu0 0.0
    %363 = vmatpush.msra.mxu0 0.0
    %364 = vmatpush.msra.mxu0 0.0
    %365 = vmatpush.msra.mxu0 0.0
    %366 = vmatpush.msra.mxu0 0.0
    %367 = vmatpush.msra.mxu0 0.0
    %368 = vmatpush.msra.mxu0 0.0
    %369 = vmatpush.msra.mxu0 %v347
    %370 = vmatmul.f32.gmra.mxu0 %v349
    %v371 = vpop.f32.mrf.mxu0
    %v372 = vadd.f32 0.0, %v371
    %373 = vmatmul.f32.gmra.mxu0 %v352
    %v374 = vpop.f32.mrf.mxu0
    %v375 = vadd.f32 0.0, %v374
    %376 = vdwg.mxu0
    %v378 = vperm.slane %v309, 0
    %v380 = vadd.f32 %v378, %v372
    %v381 = vadd.f32 %v378, %v375
    %382 = vrot.lane.b32.xlu0 %v52, 56
    %v383 = vpop.permute.xlu0 %382
    %384 = vrot.lane.b32.xlu0 %v55, 56
    %v385 = vpop.permute.xlu0 %384
    %v389 = vsel %vm228, %v266, 0
    %v392 = vsel %vm228, %v268, 0
    %394 = vmatpush.msra.mxu0 0.0
    %395 = vmatpush.msra.mxu0 0.0
    %396 = vmatpush.msra.mxu0 0.0
    %397 = vmatpush.msra.mxu0 0.0
    %398 = vmatpush.msra.mxu0 0.0
    %399 = vmatpush.msra.mxu0 0.0
    %400 = vmatpush.msra.mxu0 0.0
    %401 = vmatpush.msra.mxu0 0.0
    %402 = vmatpush.msra.mxu0 0.0
    %403 = vmatpush.msra.mxu0 0.0
    %404 = vmatpush.msra.mxu0 0.0
    %405 = vmatpush.msra.mxu0 0.0
    %406 = vmatpush.msra.mxu0 0.0
    %407 = vmatpush.msra.mxu0 0.0
    %408 = vmatpush.msra.mxu0 %v385
    %409 = vmatpush.msra.mxu0 %v383
    %410 = vmatmul.f32.gmra.mxu0 %v389
    %v411 = vpop.f32.mrf.mxu0
    %v412 = vadd.f32 0.0, %v411
    %413 = vmatmul.f32.gmra.mxu0 %v392
    %v414 = vpop.f32.mrf.mxu0
    %v415 = vadd.f32 0.0, %v414
    %416 = vdwg.mxu0
    %v417 = vmul.f32 %v412, %v303
    %v418 = vmul.f32 %v415, %v304
    %v419 = vld [vmem:[%s2 + $0x8] sm:$0xff]
    %v421 = vsel %vm63, %v417, 0
    %v424 = vsel %vm63, %v418, 0
    %426 = vmatpush.msra.mxu0 0.0
    %427 = vmatpush.msra.mxu0 0.0
    %428 = vmatpush.msra.mxu0 0.0
    %429 = vmatpush.msra.mxu0 0.0
    %430 = vmatpush.msra.mxu0 0.0
    %431 = vmatpush.msra.mxu0 0.0
    %432 = vmatpush.msra.mxu0 0.0
    %433 = vmatpush.msra.mxu0 0.0
    %434 = vmatpush.msra.mxu0 0.0
    %435 = vmatpush.msra.mxu0 0.0
    %436 = vmatpush.msra.mxu0 0.0
    %437 = vmatpush.msra.mxu0 0.0
    %438 = vmatpush.msra.mxu0 0.0
    %439 = vmatpush.msra.mxu0 0.0
    %440 = vmatpush.msra.mxu0 0.0
    %441 = vmatpush.msra.mxu0 %v419
    %442 = vmatmul.f32.gmra.mxu0 %v421
    %v443 = vpop.f32.mrf.mxu0
    %v444 = vadd.f32 0.0, %v443
    %445 = vmatmul.f32.gmra.mxu0 %v424
    %v446 = vpop.f32.mrf.mxu0
    %v447 = vadd.f32 0.0, %v446
    %448 = vdwg.mxu0
    %v449 = vadd.f32 %v380, %v444
    %v450 = vadd.f32 %v381, %v447
    %451 = vrot.lane.b32.xlu0 %v52, 48
    %v452 = vpop.permute.xlu0 %451
    %453 = vrot.lane.b32.xlu0 %v55, 48
    %v454 = vpop.permute.xlu0 %453
    %v458 = vsel %vm228, %v270, 0
    %v461 = vsel %vm228, %v272, 0
    %463 = vmatpush.msra.mxu0 0.0
    %464 = vmatpush.msra.mxu0 0.0
    %465 = vmatpush.msra.mxu0 0.0
    %466 = vmatpush.msra.mxu0 0.0
    %467 = vmatpush.msra.mxu0 0.0
    %468 = vmatpush.msra.mxu0 0.0
    %469 = vmatpush.msra.mxu0 0.0
    %470 = vmatpush.msra.mxu0 0.0
    %471 = vmatpush.msra.mxu0 0.0
    %472 = vmatpush.msra.mxu0 0.0
    %473 = vmatpush.msra.mxu0 0.0
    %474 = vmatpush.msra.mxu0 0.0
    %475 = vmatpush.msra.mxu0 0.0
    %476 = vmatpush.msra.mxu0 0.0
    %477 = vmatpush.msra.mxu0 %v454
    %478 = vmatpush.msra.mxu0 %v452
    %479 = vmatmul.f32.gmra.mxu0 %v458
    %v480 = vpop.f32.mrf.mxu0
    %v481 = vadd.f32 0.0, %v480
    %482 = vmatmul.f32.gmra.mxu0 %v461
    %v483 = vpop.f32.mrf.mxu0
    %v484 = vadd.f32 0.0, %v483
    %485 = vdwg.mxu0
    %v486 = vmul.f32 %v481, %v305
    %v487 = vmul.f32 %v484, %v306
    %v488 = vld [vmem:[%s2 + $0x10] sm:$0xff]
    %v490 = vsel %vm63, %v486, 0
    %v493 = vsel %vm63, %v487, 0
    %495 = vmatpush.msra.mxu0 0.0
    %496 = vmatpush.msra.mxu0 0.0
    %497 = vmatpush.msra.mxu0 0.0
    %498 = vmatpush.msra.mxu0 0.0
    %499 = vmatpush.msra.mxu0 0.0
    %500 = vmatpush.msra.mxu0 0.0
    %501 = vmatpush.msra.mxu0 0.0
    %502 = vmatpush.msra.mxu0 0.0
    %503 = vmatpush.msra.mxu0 0.0
    %504 = vmatpush.msra.mxu0 0.0
    %505 = vmatpush.msra.mxu0 0.0
    %506 = vmatpush.msra.mxu0 0.0
    %507 = vmatpush.msra.mxu0 0.0
    %508 = vmatpush.msra.mxu0 0.0
    %509 = vmatpush.msra.mxu0 0.0
    %510 = vmatpush.msra.mxu0 %v488
    %511 = vmatmul.f32.gmra.mxu0 %v490
    %v512 = vpop.f32.mrf.mxu0
    %v513 = vadd.f32 0.0, %v512
    %514 = vmatmul.f32.gmra.mxu0 %v493
    %v515 = vpop.f32.mrf.mxu0
    %v516 = vadd.f32 0.0, %v515
    %517 = vdwg.mxu0
    %v518 = vadd.f32 %v449, %v513
    %v519 = vadd.f32 %v450, %v516
    %520 = vrot.lane.b32.xlu0 %v52, 40
    %v521 = vpop.permute.xlu0 %520
    %522 = vrot.lane.b32.xlu0 %v55, 40
    %v523 = vpop.permute.xlu0 %522
    %v527 = vsel %vm228, %v274, 0
    %v530 = vsel %vm228, %v276, 0
    %532 = vmatpush.msra.mxu0 0.0
    %533 = vmatpush.msra.mxu0 0.0
    %534 = vmatpush.msra.mxu0 0.0
    %535 = vmatpush.msra.mxu0 0.0
    %536 = vmatpush.msra.mxu0 0.0
    %537 = vmatpush.msra.mxu0 0.0
    %538 = vmatpush.msra.mxu0 0.0
    %539 = vmatpush.msra.mxu0 0.0
    %540 = vmatpush.msra.mxu0 0.0
    %541 = vmatpush.msra.mxu0 0.0
    %542 = vmatpush.msra.mxu0 0.0
    %543 = vmatpush.msra.mxu0 0.0
    %544 = vmatpush.msra.mxu0 0.0
    %545 = vmatpush.msra.mxu0 0.0
    %546 = vmatpush.msra.mxu0 %v523
    %547 = vmatpush.msra.mxu0 %v521
    %548 = vmatmul.f32.gmra.mxu0 %v527
    %v549 = vpop.f32.mrf.mxu0
    %v550 = vadd.f32 0.0, %v549
    %551 = vmatmul.f32.gmra.mxu0 %v530
    %v552 = vpop.f32.mrf.mxu0
    %v553 = vadd.f32 0.0, %v552
    %554 = vdwg.mxu0
    %v555 = vmul.f32 %v550, %v307
    %v556 = vmul.f32 %v553, %v308
    %v557 = vld [vmem:[%s2 + $0x18] sm:$0xff]
    %v559 = vsel %vm63, %v555, 0
    %v562 = vsel %vm63, %v556, 0
    %564 = vmatpush.msra.mxu0 0.0
    %565 = vmatpush.msra.mxu0 0.0
    %566 = vmatpush.msra.mxu0 0.0
    %567 = vmatpush.msra.mxu0 0.0
    %568 = vmatpush.msra.mxu0 0.0
    %569 = vmatpush.msra.mxu0 0.0
    %570 = vmatpush.msra.mxu0 0.0
    %571 = vmatpush.msra.mxu0 0.0
    %572 = vmatpush.msra.mxu0 0.0
    %573 = vmatpush.msra.mxu0 0.0
    %574 = vmatpush.msra.mxu0 0.0
    %575 = vmatpush.msra.mxu0 0.0
    %576 = vmatpush.msra.mxu0 0.0
    %577 = vmatpush.msra.mxu0 0.0
    %578 = vmatpush.msra.mxu0 0.0
    %579 = vmatpush.msra.mxu0 %v557
    %580 = vmatmul.f32.gmra.mxu0 %v559
    %v581 = vpop.f32.mrf.mxu0
    %v582 = vadd.f32 0.0, %v581
    %583 = vmatmul.f32.gmra.mxu0 %v562
    %v584 = vpop.f32.mrf.mxu0
    %v585 = vadd.f32 0.0, %v584
    %586 = vdwg.mxu0
    %v587 = vadd.f32 %v518, %v582
    %v588 = vadd.f32 %v519, %v585
    %589 = vst.msk [vmem:[#allocation2] sm:$0xff] %vm27, %v587
    %590 = vst.msk [vmem:[#allocation2 + $0x8] sm:$0xff] %vm27, %v588
    // Predicated region
    $region22: #{multi_head_attention.1} parent=1 // pred_check
      _
    $region23: #{multi_head_attention.1} parent=1 // pred_check_branch
      %592 = sbr.rel (0) target = $region25
    $region24: #{multi_head_attention.1} parent=1 // pred_region
      %594 = vsyncadd [#allocation3], 0
      %s595 = sshll.u32 [#allocation2], 4
      %s596 = int_to_ptr.vmem [resolvable:$true] %s595
      %s597 = sshll.u32 %s5, 4
      %s598 = int_to_ptr.hbm [resolvable:$true] %s597
      %603 = dma.vmem_to_hbm [thread:$0]  %s596, 256, %s598, [#allocation3], 128, 128, 8
    $region25: #{multi_head_attention.1} parent=1 // pred_fallthru
      _
    // Predicated region
    $region26: #{multi_head_attention.1} parent=1 // pred_check
      _
    $region27: #{multi_head_attention.1} parent=1 // pred_check_branch
      %605 = sbr.rel (0) target = $region29
    $region28: #{multi_head_attention.1} parent=1 // pred_region
      %607 = dma.done [#allocation3], 256
    $region29: #{multi_head_attention.1} parent=1 // pred_fallthru
      _
    %608 = vsyncpa [#allocation3], 1

</llo_original>
